<compile_context>
chip_gen: v7x
topology: tpu7x:2x2x1
jax: 0.10.0
libtpu: 0.0.40
codegen_flags: <defaults>
</compile_context>

<pallas_src>
import jax
import jax.numpy as jnp
from jax.experimental import pallas as pl
from jax.experimental.pallas import tpu as pltpu

NUM_FEATURES = 4
HIDDEN_FEATURES = 6
NUM_CLASSES = 3

H_PAD = 8                      # hidden 6 -> 8 (one f32 sublane group)
DEFAULT_BLOCK_BATCH = 8192     # rows per grid step


def _round_up(n, m):
    return ((n + m - 1) // m) * m


def _mlp_kernel(x_ref, w1_ref, b1_ref, w2_ref, b2_ref, o_ref):
    # x_ref:  (TB, F)   w1_ref: (F, H_PAD)   b1_ref: (1, H_PAD)
    # w2_ref: (H_PAD, C)   b2_ref: (1, C)    o_ref: (TB, C)
    x = x_ref[...]

    # lin1 + sigmoid. Padded hidden columns are sigmoid(0) = 0.5, but the
    # matching rows of w2 are exactly zero, so they add nothing to lin2.
    h = jnp.dot(x, w1_ref[...], preferred_element_type=jnp.float32) + b1_ref[...]
    h = jax.nn.sigmoid(h)

    # lin2 -> logits over the true class count (no padded class lanes to mask).
    logits = jnp.dot(h, w2_ref[...], preferred_element_type=jnp.float32) + b2_ref[...]

    # Numerically stable log_softmax over the class axis.
    m = jnp.max(logits, axis=-1, keepdims=True)
    shifted = logits - m
    lse = jnp.log(jnp.sum(jnp.exp(shifted), axis=-1, keepdims=True))
    o_ref[...] = (shifted - lse).astype(o_ref.dtype)


def prepare_params(w1, b1, w2, b2):
    """Pad parameters ONCE, outside the hot path.

    w1: (NUM_FEATURES, HIDDEN_FEATURES)   b1: (HIDDEN_FEATURES,)
    w2: (HIDDEN_FEATURES, NUM_CLASSES)    b2: (NUM_CLASSES,)
    (PyTorch stores weights as (out, in); pass W.T.)

    Invariant: padded rows of w2 must stay exactly zero, so the sigmoid(0)=0.5
    values in the padded hidden columns never leak into the logits.
    """
    hp = H_PAD - HIDDEN_FEATURES
    w1p = jnp.pad(w1.astype(jnp.float32), ((0, 0), (0, hp)))
    b1p = jnp.pad(b1.astype(jnp.float32).reshape(1, -1), ((0, 0), (0, hp)))
    w2p = jnp.pad(w2.astype(jnp.float32), ((0, hp), (0, 0)))
    b2p = b2.astype(jnp.float32).reshape(1, -1)
    return w1p, b1p, w2p, b2p


def multiclass_net_forward(x, params, *, block_batch=DEFAULT_BLOCK_BATCH,
                           out_dtype=jnp.float32):
    """x: (B, NUM_FEATURES) f32; params from prepare_params().
    Returns (B, NUM_CLASSES) log-probs (out_dtype)."""
    w1p, b1p, w2p, b2p = params
    B, F = x.shape
    H = w1p.shape[1]
    C = w2p.shape[1]

    # Batch tile: multiple of the f32 sublane count (8), capped at block_batch.
    tb = _round_up(min(block_batch, B), 8)
    # v7x: keep >= 2 grid steps when the batch allows, so both TCs get work.
    if B > 8 and pl.cdiv(B, tb) < 2:
        tb = _round_up(pl.cdiv(B, 2), 8)
    grid = pl.cdiv(B, tb)   # ragged tail block handled by masked writes

    return pl.pallas_call(
        _mlp_kernel,
        out_shape=jax.ShapeDtypeStruct((B, C), out_dtype),
        grid=(grid,),
        in_specs=[
            pl.BlockSpec((tb, F), lambda i: (i, 0)),   # batch-tiled input
            pl.BlockSpec((F, H), lambda i: (0, 0)),    # grid-invariant weights
            pl.BlockSpec((1, H), lambda i: (0, 0)),
            pl.BlockSpec((H, C), lambda i: (0, 0)),
            pl.BlockSpec((1, C), lambda i: (0, 0)),
        ],
        out_specs=pl.BlockSpec((tb, C), lambda i: (i, 0)),
        compiler_params=pltpu.CompilerParams(
            dimension_semantics=("parallel",),
        ),
    )(x, w1p, b1p, w2p, b2p)


def init_params(key):
    """Deterministic init matching PyTorch nn.Linear default (U[-1/sqrt(fan_in), ...])."""
    k1, k2, k3, k4 = jax.random.split(key, 4)
    bound1 = 1.0 / (NUM_FEATURES ** 0.5)
    bound2 = 1.0 / (HIDDEN_FEATURES ** 0.5)
    # stored as (in, out) = PyTorch weight transposed
    w1 = jax.random.uniform(k1, (NUM_FEATURES, HIDDEN_FEATURES), jnp.float32,
                            minval=-bound1, maxval=bound1)
    b1 = jax.random.uniform(k2, (HIDDEN_FEATURES,), jnp.float32,
                            minval=-bound1, maxval=bound1)
    w2 = jax.random.uniform(k3, (HIDDEN_FEATURES, NUM_CLASSES), jnp.float32,
                            minval=-bound2, maxval=bound2)
    b2 = jax.random.uniform(k4, (NUM_CLASSES,), jnp.float32,
                            minval=-bound2, maxval=bound2)
    return w1, b1, w2, b2


def _reference(x, w1, b1, w2, b2):
    hp = jax.lax.Precision.HIGHEST
    h = jax.nn.sigmoid(jnp.dot(x, w1, precision=hp) + b1)
    logits = jnp.dot(h, w2, precision=hp) + b2
    return jax.nn.log_softmax(logits, axis=1)


if __name__ == "__main__":
    key = jax.random.PRNGKey(0)
    kx, kp = jax.random.split(key)

    BATCH = 8
    x = jax.random.normal(kx, (BATCH, NUM_FEATURES), dtype=jnp.float32)
    w1, b1, w2, b2 = init_params(kp)

    params = prepare_params(w1, b1, w2, b2)   # once, outside the hot path
    out = multiclass_net_forward(x, params)
    out = jax.block_until_ready(out)

    ref = _reference(x, w1, b1, w2, b2)
    assert out.shape == (BATCH, NUM_CLASSES)
    assert jnp.allclose(out, ref, atol=1e-4, rtol=1e-4), \
        float(jnp.max(jnp.abs(out - ref)))

    print("KERNEL_OK")
</pallas_src>

<mosaic_0001>
module attributes {stable_mosaic.version = 11 : i64} {
  func.func @_mlp_kernel(%arg0: i32, %arg1: memref<8x4xf32, #tpu.memory_space<vmem>>, %arg2: memref<4x8xf32, #tpu.memory_space<vmem>>, %arg3: memref<1x8xf32, #tpu.memory_space<vmem>>, %arg4: memref<8x3xf32, #tpu.memory_space<vmem>>, %arg5: memref<1x3xf32, #tpu.memory_space<vmem>>, %arg6: memref<8x3xf32, #tpu.memory_space<vmem>>) attributes {dimension_semantics = [#tpu.dimension_semantics<parallel>], iteration_bounds = array<i64: 1>, scalar_prefetch = 0 : i64, scratch_operands = 0 : i64, tpu.core_type = #tpu.core_type<tc>, window_params = [{transform_indices = @transform_0, window_bounds = array<i64: 8, 4>}, {pipeline_mode = #tpu.pipeline_mode<synchronous>, transform_indices = @transform_1, window_bounds = array<i64: 4, 8>}, {pipeline_mode = #tpu.pipeline_mode<synchronous>, transform_indices = @transform_2, window_bounds = array<i64: 1, 8>}, {pipeline_mode = #tpu.pipeline_mode<synchronous>, transform_indices = @transform_3, window_bounds = array<i64: 8, 3>}, {pipeline_mode = #tpu.pipeline_mode<synchronous>, transform_indices = @transform_4, window_bounds = array<i64: 1, 3>}, {transform_indices = @transform_5, window_bounds = array<i64: 8, 3>}]} {
    %c0 = arith.constant 0 : index
    %c0_0 = arith.constant 0 : index
    %0 = vector.load %arg1[%c0, %c0_0] : memref<8x4xf32, #tpu.memory_space<vmem>>, vector<8x4xf32>
    %c0_1 = arith.constant 0 : index
    %c0_2 = arith.constant 0 : index
    %1 = vector.load %arg2[%c0_1, %c0_2] : memref<4x8xf32, #tpu.memory_space<vmem>>, vector<4x8xf32>
    %cst = arith.constant dense<0.000000e+00> : vector<8x8xf32>
    %2 = tpu.matmul %0, %1, %cst {dimension_numbers = #tpu.dot_dimension_numbers<[1], [0], [0], [1], [0, 0, 1, 1], [], []>} : vector<8x4xf32>, vector<4x8xf32>, vector<8x8xf32> -> vector<8x8xf32>
    %c0_3 = arith.constant 0 : index
    %c0_4 = arith.constant 0 : index
    %3 = vector.load %arg3[%c0_3, %c0_4] : memref<1x8xf32, #tpu.memory_space<vmem>>, vector<1x8xf32>
    %4 = vector.broadcast %3 : vector<1x8xf32> to vector<8x8xf32>
    %5 = arith.addf %2, %4 : vector<8x8xf32>
    %6 = arith.negf %5 : vector<8x8xf32>
    %7 = math.exp %6 : vector<8x8xf32>
    %cst_5 = arith.constant 1.000000e+00 : f32
    %8 = vector.broadcast %cst_5 : f32 to vector<8x8xf32>
    %9 = arith.addf %8, %7 : vector<8x8xf32>
    %10 = arith.divf %8, %9 : vector<8x8xf32>
    %c0_6 = arith.constant 0 : index
    %c0_7 = arith.constant 0 : index
    %11 = vector.load %arg4[%c0_6, %c0_7] : memref<8x3xf32, #tpu.memory_space<vmem>>, vector<8x3xf32>
    %cst_8 = arith.constant dense<0.000000e+00> : vector<8x3xf32>
    %12 = tpu.matmul %10, %11, %cst_8 {dimension_numbers = #tpu.dot_dimension_numbers<[1], [0], [0], [1], [0, 0, 1, 1], [], []>} : vector<8x8xf32>, vector<8x3xf32>, vector<8x3xf32> -> vector<8x3xf32>
    %c0_9 = arith.constant 0 : index
    %c0_10 = arith.constant 0 : index
    %13 = vector.load %arg5[%c0_9, %c0_10] : memref<1x3xf32, #tpu.memory_space<vmem>>, vector<1x3xf32>
    %14 = vector.broadcast %13 : vector<1x3xf32> to vector<8x3xf32>
    %15 = arith.addf %12, %14 : vector<8x3xf32>
    %cst_11 = arith.constant dense<0xFF800000> : vector<8xf32>
    %16 = vector.multi_reduction <maximumf>, %15, %cst_11 [1] : vector<8x3xf32> to vector<8xf32>
    %17 = vector.shape_cast %16 : vector<8xf32> to vector<8x1xf32>
    %18 = vector.broadcast %17 : vector<8x1xf32> to vector<8x3xf32>
    %19 = arith.subf %15, %18 : vector<8x3xf32>
    %20 = math.exp %19 : vector<8x3xf32>
    %cst_12 = arith.constant dense<0.000000e+00> : vector<8xf32>
    %21 = vector.multi_reduction <add>, %20, %cst_12 [1] : vector<8x3xf32> to vector<8xf32>
    %22 = vector.shape_cast %21 : vector<8xf32> to vector<8x1xf32>
    %23 = math.log %22 : vector<8x1xf32>
    %24 = vector.broadcast %23 : vector<8x1xf32> to vector<8x3xf32>
    %25 = arith.subf %19, %24 : vector<8x3xf32>
    %c0_13 = arith.constant 0 : index
    %c0_14 = arith.constant 0 : index
    %26 = vector.load %arg6[%c0_13, %c0_14] : memref<8x3xf32, #tpu.memory_space<vmem>>, vector<8x3xf32>
    tpu.vector_store %arg6[%c0_13, %c0_14], %25 {strides = array<i32>} : memref<8x3xf32, #tpu.memory_space<vmem>>, vector<8x3xf32>,
    return
  }
  func.func @transform_0(%arg0: i32) -> (i32, i32) {
    %c0_i32 = arith.constant 0 : i32
    %c0_i32_0 = arith.constant 0 : i32
    return %arg0, %c0_i32 : i32, i32
  }
  func.func @transform_1(%arg0: i32) -> (i32, i32) {
    %c0_i32 = arith.constant 0 : i32
    %c0_i32_0 = arith.constant 0 : i32
    %c0_i32_1 = arith.constant 0 : i32
    return %c0_i32, %c0_i32_0 : i32, i32
  }
  func.func @transform_2(%arg0: i32) -> (i32, i32) {
    %c0_i32 = arith.constant 0 : i32
    %c0_i32_0 = arith.constant 0 : i32
    %c0_i32_1 = arith.constant 0 : i32
    return %c0_i32, %c0_i32_0 : i32, i32
  }
  func.func @transform_3(%arg0: i32) -> (i32, i32) {
    %c0_i32 = arith.constant 0 : i32
    %c0_i32_0 = arith.constant 0 : i32
    %c0_i32_1 = arith.constant 0 : i32
    return %c0_i32, %c0_i32_0 : i32, i32
  }
  func.func @transform_4(%arg0: i32) -> (i32, i32) {
    %c0_i32 = arith.constant 0 : i32
    %c0_i32_0 = arith.constant 0 : i32
    %c0_i32_1 = arith.constant 0 : i32
    return %c0_i32, %c0_i32_0 : i32, i32
  }
  func.func @transform_5(%arg0: i32) -> (i32, i32) {
    %c0_i32 = arith.constant 0 : i32
    %c0_i32_0 = arith.constant 0 : i32
    return %arg0, %c0_i32 : i32, i32
  }
}

</mosaic_0001>

<llo_original>
// kernel: tpu_custom_call.1
$region0: #{tpu_custom_call.1}
  #allocation0 [shape = 'u32[]', space=smem, size = 0x4, offset = 0x4, fixed_abs, tag = 'smem constant byte address 0x4 - core index']
  #allocation1 [shape = 'u32[144,128]{1,0:T(1,128)}', space=vmem, size = 0x12000, scoped, tag = 'internal scratch']
  %s0 = inlined_call_operand.vmem [shape: f32[8,4], index: 0, kind: input, shape index: {}]
  %s1 = inlined_call_operand.vmem [shape: f32[4,8], index: 1, kind: input, shape index: {}]
  %s2 = inlined_call_operand.vmem [shape: f32[1,8], index: 2, kind: input, shape index: {}]
  %s3 = inlined_call_operand.vmem [shape: f32[8,3], index: 3, kind: input, shape index: {}]
  %s4 = inlined_call_operand.vmem [shape: f32[1,3], index: 4, kind: input, shape index: {}]
  %s5 = inlined_call_operand.vmem [shape: f32[8,3], index: 5, kind: output, shape index: {}]
  %s6 = sld [smem:[#allocation0]]
  $region30: #{tpu_custom_call.1} parent=0
    _
  %s8 = ssub.s32 1, %s6
  %s9 = scalar_select 0, %s8, %s6
  // Predicated region
  $region2: #{tpu_custom_call.1} parent=0 // pred_check
    _
  $region3: #{tpu_custom_call.1} parent=0 // pred_check_branch
    %11 = sbr.rel (0) target = $region5
  $region4: #{tpu_custom_call.1} parent=0 // pred_region
    _
  $region5: #{tpu_custom_call.1} parent=0 // pred_fallthru
    _
  // Predicated region
  $region6: #{tpu_custom_call.1} parent=0 // pred_check
    _
  $region7: #{tpu_custom_call.1} parent=0 // pred_check_branch
    %13 = sbr.rel (0) target = $region9
  $region8: #{tpu_custom_call.1} parent=0 // pred_region
    _
  $region9: #{tpu_custom_call.1} parent=0 // pred_fallthru
    _
  // Predicated region
  $region10: #{tpu_custom_call.1} parent=0 // pred_check
    _
  $region11: #{tpu_custom_call.1} parent=0 // pred_check_branch
    %15 = sbr.rel (0) target = $region13
  $region12: #{tpu_custom_call.1} parent=0 // pred_region
    _
  $region13: #{tpu_custom_call.1} parent=0 // pred_fallthru
    _
  // Predicated region
  $region14: #{tpu_custom_call.1} parent=0 // pred_check
    _
  $region15: #{tpu_custom_call.1} parent=0 // pred_check_branch
    %17 = sbr.rel (0) target = $region17
  $region16: #{tpu_custom_call.1} parent=0 // pred_region
    _
  $region17: #{tpu_custom_call.1} parent=0 // pred_fallthru
    _
  // Predicated region
  $region18: #{tpu_custom_call.1} parent=0 // pred_check
    _
  $region19: #{tpu_custom_call.1} parent=0 // pred_check_branch
    %19 = sbr.rel (0) target = $region21
  $region20: #{tpu_custom_call.1} parent=0 // pred_region
    _
  $region21: #{tpu_custom_call.1} parent=0 // pred_fallthru
    _
  %v20 = vld [vmem:[%s0] sm:$0xff]
  %v21 = vld [vmem:[%s1] sm:$0xf]
  %v22 = vld [vmem:[%s2] sm:$0x1]
  %v24 = vlaneseq
  %v25 = vshrl.u32 %v24, 7
  %v26 = vsub.s32 0, %v25
  %v27 = vrot.slane %v22, %v26
  %vm29 = vcmask 31744
  %v31 = vsel %vm29, %v20, 0
  %vm33 = vcmask 1043456
  %v35 = vsel %vm33, %v21, 0
  %37 = vmatprep.subr.mxu0 0.0
  %38 = vmatpush1.msra.mxu0 %v35
  %39 = vmatprep.subr.mxu0 0.0
  %40 = vmatpush1.msra.mxu0 0.0
  %41 = vmatprep.subr.mxu0 0.0
  %42 = vmatpush1.msra.mxu0 0.0
  %43 = vmatprep.subr.mxu0 0.0
  %44 = vmatpush1.msra.mxu0 0.0
  %45 = vmatprep.subr.mxu0 0.0
  %46 = vmatpush1.msra.mxu0 0.0
  %47 = vmatprep.subr.mxu0 0.0
  %48 = vmatpush1.msra.mxu0 0.0
  %49 = vmatprep.subr.mxu0 0.0
  %50 = vmatpush1.msra.mxu0 0.0
  %51 = vmatprep.subr.mxu0 0.0
  %52 = vmatpush1.msra.mxu0 0.0
  %53 = vmatprep.subr.mxu0 0.0
  %54 = vmatpush1.msra.mxu0 0.0
  %55 = vmatprep.subr.mxu0 0.0
  %56 = vmatpush1.msra.mxu0 0.0
  %57 = vmatprep.subr.mxu0 0.0
  %58 = vmatpush1.msra.mxu0 0.0
  %59 = vmatprep.subr.mxu0 0.0
  %60 = vmatpush1.msra.mxu0 0.0
  %61 = vmatprep.subr.mxu0 0.0
  %62 = vmatpush1.msra.mxu0 0.0
  %63 = vmatprep.subr.mxu0 0.0
  %64 = vmatpush1.msra.mxu0 0.0
  %65 = vmatprep.subr.mxu0 0.0
  %66 = vmatpush1.msra.mxu0 0.0
  %67 = vmatprep.subr.mxu0 0.0
  %68 = vmatpush1.msra.mxu0 0.0
  %69 = vmatprep.subr.mxu0 0.0
  %70 = vmatpush1.msra.mxu0 0.0
  %71 = vmatprep.subr.mxu0 0.0
  %72 = vmatpush1.msra.mxu0 0.0
  %73 = vmatprep.subr.mxu0 0.0
  %74 = vmatpush1.msra.mxu0 0.0
  %75 = vmatprep.subr.mxu0 0.0
  %76 = vmatpush1.msra.mxu0 0.0
  %77 = vmatprep.subr.mxu0 0.0
  %78 = vmatpush1.msra.mxu0 0.0
  %79 = vmatprep.subr.mxu0 0.0
  %80 = vmatpush1.msra.mxu0 0.0
  %81 = vmatprep.subr.mxu0 0.0
  %82 = vmatpush1.msra.mxu0 0.0
  %83 = vmatprep.subr.mxu0 0.0
  %84 = vmatpush1.msra.mxu0 0.0
  %85 = vmatprep.subr.mxu0 0.0
  %86 = vmatpush1.msra.mxu0 0.0
  %87 = vmatprep.subr.mxu0 0.0
  %88 = vmatpush1.msra.mxu0 0.0
  %89 = vmatprep.subr.mxu0 0.0
  %90 = vmatpush1.msra.mxu0 0.0
  %91 = vmatprep.subr.mxu0 0.0
  %92 = vmatpush1.msra.mxu0 0.0
  %93 = vmatprep.subr.mxu0 0.0
  %94 = vmatpush1.msra.mxu0 0.0
  %95 = vmatprep.subr.mxu0 0.0
  %96 = vmatpush1.msra.mxu0 0.0
  %97 = vmatprep.subr.mxu0 0.0
  %98 = vmatpush1.msra.mxu0 0.0
  %99 = vmatprep.subr.mxu0 0.0
  %100 = vmatpush1.msra.mxu0 0.0
  %101 = vmatprep.mubr.f32.mxu0 0.0
  %102 = vmatmul.mubr.f32.gmra.mrb[0].mxu0 %v31
  %v103 = vpop.f32.mrb[0].mxu0
  %v104 = vadd.f32 %v27, %v103
  %v105 = vpop.f32.mrb[0].mxu0
  %106 = vdwg.mxu0
  %v107 = vxor.u32 %v104, 2147483648
  %v108 = vmul.f32 %v107, 1.442695
  %v109 = vpow.pop %v108
  %v110 = vadd.f32 %v109, 1.0
  %v111 = vrcp.pop %v110
  %v112 = vmul.f32 1.0, %v111
  %v113 = vld [vmem:[%s3] sm:$0xff]
  %v114 = vld [vmem:[%s4] sm:$0x1]
  %v116 = vlaneseq
  %v117 = vshrl.u32 %v116, 7
  %v118 = vsub.s32 0, %v117
  %v119 = vrot.slane %v114, %v118
  %vm121 = vcmask 64512
  %v123 = vsel %vm121, %v112, 0
  %125 = vmatprep.subr.mxu0 0.0
  %126 = vmatpush1.msra.mxu0 %v113
  %127 = vmatprep.subr.mxu0 0.0
  %128 = vmatpush1.msra.mxu0 0.0
  %129 = vmatprep.subr.mxu0 0.0
  %130 = vmatpush1.msra.mxu0 0.0
  %131 = vmatprep.subr.mxu0 0.0
  %132 = vmatpush1.msra.mxu0 0.0
  %133 = vmatprep.subr.mxu0 0.0
  %134 = vmatpush1.msra.mxu0 0.0
  %135 = vmatprep.subr.mxu0 0.0
  %136 = vmatpush1.msra.mxu0 0.0
  %137 = vmatprep.subr.mxu0 0.0
  %138 = vmatpush1.msra.mxu0 0.0
  %139 = vmatprep.subr.mxu0 0.0
  %140 = vmatpush1.msra.mxu0 0.0
  %141 = vmatprep.subr.mxu0 0.0
  %142 = vmatpush1.msra.mxu0 0.0
  %143 = vmatprep.subr.mxu0 0.0
  %144 = vmatpush1.msra.mxu0 0.0
  %145 = vmatprep.subr.mxu0 0.0
  %146 = vmatpush1.msra.mxu0 0.0
  %147 = vmatprep.subr.mxu0 0.0
  %148 = vmatpush1.msra.mxu0 0.0
  %149 = vmatprep.subr.mxu0 0.0
  %150 = vmatpush1.msra.mxu0 0.0
  %151 = vmatprep.subr.mxu0 0.0
  %152 = vmatpush1.msra.mxu0 0.0
  %153 = vmatprep.subr.mxu0 0.0
  %154 = vmatpush1.msra.mxu0 0.0
  %155 = vmatprep.subr.mxu0 0.0
  %156 = vmatpush1.msra.mxu0 0.0
  %157 = vmatprep.subr.mxu0 0.0
  %158 = vmatpush1.msra.mxu0 0.0
  %159 = vmatprep.subr.mxu0 0.0
  %160 = vmatpush1.msra.mxu0 0.0
  %161 = vmatprep.subr.mxu0 0.0
  %162 = vmatpush1.msra.mxu0 0.0
  %163 = vmatprep.subr.mxu0 0.0
  %164 = vmatpush1.msra.mxu0 0.0
  %165 = vmatprep.subr.mxu0 0.0
  %166 = vmatpush1.msra.mxu0 0.0
  %167 = vmatprep.subr.mxu0 0.0
  %168 = vmatpush1.msra.mxu0 0.0
  %169 = vmatprep.subr.mxu0 0.0
  %170 = vmatpush1.msra.mxu0 0.0
  %171 = vmatprep.subr.mxu0 0.0
  %172 = vmatpush1.msra.mxu0 0.0
  %173 = vmatprep.subr.mxu0 0.0
  %174 = vmatpush1.msra.mxu0 0.0
  %175 = vmatprep.subr.mxu0 0.0
  %176 = vmatpush1.msra.mxu0 0.0
  %177 = vmatprep.subr.mxu0 0.0
  %178 = vmatpush1.msra.mxu0 0.0
  %179 = vmatprep.subr.mxu0 0.0
  %180 = vmatpush1.msra.mxu0 0.0
  %181 = vmatprep.subr.mxu0 0.0
  %182 = vmatpush1.msra.mxu0 0.0
  %183 = vmatprep.subr.mxu0 0.0
  %184 = vmatpush1.msra.mxu0 0.0
  %185 = vmatprep.subr.mxu0 0.0
  %186 = vmatpush1.msra.mxu0 0.0
  %187 = vmatprep.subr.mxu0 0.0
  %188 = vmatpush1.msra.mxu0 0.0
  %189 = vmatprep.mubr.f32.mxu0 0.0
  %190 = vmatmul.mubr.f32.gmra.mrb[0].mxu0 %v123
  %v191 = vpop.f32.mrb[0].mxu0
  %v192 = vadd.f32 %v119, %v191
  %v193 = vpop.f32.mrb[0].mxu0
  %194 = vdwg.mxu0
  %vm195 = vcmask 23552
  %v196 = vsel %vm195, %v192, -inf
  %197 = vmax.xlane.f32.xlu0 %v196
  %v198 = vpop.xlane.xlu0 %197
  %v199 = vsub.f32 %v192, %v198
  %v200 = vmul.f32 %v199, 1.442695
  %v201 = vpow.pop %v200
  %v202 = vsel %vm195, %v201, 0.0
  %203 = vadd.xlane.f32.xlu0 %v202
  %v204 = vpop.xlane.xlu0 %203
  %v205 = vlog2.pop %v204
  %v206 = vmul.f32 %v205, 0.6931472
  %v207 = vsub.f32 %v199, %v206
  %208 = vst.msk [vmem:[%s5] sm:$0xff] %vm195, %v207
  // Predicated region
  $region22: #{tpu_custom_call.1} parent=0 // pred_check
    _
  $region23: #{tpu_custom_call.1} parent=0 // pred_check_branch
    %210 = sbr.rel (0) target = $region25
  $region24: #{tpu_custom_call.1} parent=0 // pred_region
    _
  $region25: #{tpu_custom_call.1} parent=0 // pred_fallthru
    _
  // Predicated region
  $region26: #{tpu_custom_call.1} parent=0 // pred_check
    _
  $region27: #{tpu_custom_call.1} parent=0 // pred_check_branch
    %212 = sbr.rel (0) target = $region29
  $region28: #{tpu_custom_call.1} parent=0 // pred_region
    _
  $region29: #{tpu_custom_call.1} parent=0 // pred_fallthru
    _

</llo_original>
